<compile_context>
chip_gen: v5e
topology: v5e:2x2
jax: 0.10.0
libtpu: 0.0.40
codegen_flags: <defaults>
</compile_context>

<pallas_src>
import functools

import jax
import jax.numpy as jnp
from jax.experimental import pallas as pl
from jax.experimental.pallas import tpu as pltpu


def _round_up(n: int, m: int) -> int:
    return ((n + m - 1) // m) * m


# --------------------------------------------------------------------------
# One-time parameter prep (pad + pack).  NOT in the per-call path.
# --------------------------------------------------------------------------
def prepare_custom_nn_params(params, mxu_dtype=jnp.bfloat16):
    """Pad every layer to a common lane-dense D_pad and stack.

    Returns dict with:
      w: (L, D_pad, D_pad) mxu_dtype   zero-padded weights (din rows, dout cols)
      b: (L, 1, D_pad)     float32     zero-padded biases
      plus static metadata (num_hidden, n_classes, d_pad, mxu_dtype).
    """
    wbs = list(params["f"]) + [params["clf"]]
    num_hidden = len(params["f"])
    dims = [wbs[0][0].shape[0]] + [w.shape[1] for (w, _) in wbs]
    d_pad = max(_round_up(d, 128) for d in dims)

    w_list, b_list = [], []
    for (w, b) in wbs:
        w_list.append(jnp.pad(w, ((0, d_pad - w.shape[0]), (0, d_pad - w.shape[1]))))
        b_list.append(jnp.pad(b, ((0, 0), (0, d_pad - b.shape[1]))))
    return {
        "w": jnp.stack(w_list).astype(mxu_dtype),       # (L, D_pad, D_pad)
        "b": jnp.stack(b_list).astype(jnp.float32),     # (L, 1, D_pad)
        "num_hidden": num_hidden,
        "n_features": dims[0],
        "n_classes": dims[-1],
        "d_pad": d_pad,
        "mxu_dtype": mxu_dtype,
    }


# --------------------------------------------------------------------------
# Fused kernel: whole forward pass, intermediates never touch HBM.
# --------------------------------------------------------------------------
def _fused_mlp_kernel(x_ref, w_ref, b_ref, o_ref, *, num_layers, num_hidden,
                      apply_sigmoid, mxu_dtype, approx_recip):
    """x_ref: (Bt, D), w_ref: (L, D, D), b_ref: (L, 1, D), o_ref: (Bt, D)."""
    y = x_ref[...]                                   # f32 activations
    for li in range(num_layers):                     # static Python unroll
        w = w_ref[li]                                # (D, D), mxu_dtype
        b = b_ref[li]                                # (1, D), f32 -> broadcasts
        y = jnp.dot(y.astype(mxu_dtype), w,
                    preferred_element_type=jnp.float32) + b
        if li < num_hidden:
            if apply_sigmoid:
                # exp -> EUP; reciprocal -> EUP when approx=True (fast path).
                y = pl.reciprocal(1.0 + jnp.exp(-y), approx=approx_recip)
            else:
                y = jnp.maximum(y, 0.0)              # fused ReLU branch
    o_ref[...] = y.astype(o_ref.dtype)


# --------------------------------------------------------------------------
# Forward wrapper.
# --------------------------------------------------------------------------
def custom_nn_forward(prepped, x, activation="sigmoid", *, batch_tile=256):
    """Forward pass of CustomNN as a single fused Pallas kernel.

    x: (B, n_features) float32.  `prepped` comes from prepare_custom_nn_params.
    """
    w, b = prepped["w"], prepped["b"]
    num_layers = int(w.shape[0])
    num_hidden = prepped["num_hidden"]
    d_pad = prepped["d_pad"]
    n_classes = prepped["n_classes"]
    mxu_dtype = prepped["mxu_dtype"]

    B, F = x.shape
    sub = 16 if mxu_dtype == jnp.bfloat16 else 8     # bf16 sublane packing
    use_grid = B > batch_tile
    if use_grid:
        assert batch_tile % sub == 0 and batch_tile % 8 == 0
        B_pad = _round_up(B, batch_tile)
    else:
        B_pad = _round_up(B, sub)

    x_pad = jnp.pad(x, ((0, B_pad - B), (0, d_pad - F)))

    kernel = functools.partial(
        _fused_mlp_kernel,
        num_layers=num_layers,
        num_hidden=num_hidden,
        apply_sigmoid=(activation == "sigmoid"),
        mxu_dtype=mxu_dtype,
        approx_recip=(mxu_dtype == jnp.bfloat16),
    )

    cost = pl.CostEstimate(
        flops=2 * B_pad * num_layers * d_pad * d_pad,
        transcendentals=(B_pad * d_pad * num_hidden) if activation == "sigmoid" else 0,
        bytes_accessed=(x_pad.size * x_pad.dtype.itemsize
                        + w.size * w.dtype.itemsize
                        + b.size * b.dtype.itemsize
                        + B_pad * d_pad * 4),
    )
    out_shape = jax.ShapeDtypeStruct((B_pad, d_pad), jnp.float32)

    if not use_grid:
        # Small batch: single full-array VMEM block, no pipeline machinery.
        vmem = pl.BlockSpec(memory_space=pltpu.MemorySpace.VMEM)
        out_pad = pl.pallas_call(
            kernel,
            out_shape=out_shape,
            in_specs=[vmem, vmem, vmem],
            out_specs=vmem,
            cost_estimate=cost,
        )(x_pad, w, b)
    else:
        # Large batch: tile the batch axis; "parallel" lets v7x shard the two
        # TensorCores.  Weights/biases use a constant index_map -> resident.
        grid = (B_pad // batch_tile,)
        out_pad = pl.pallas_call(
            kernel,
            out_shape=out_shape,
            grid=grid,
            in_specs=[
                pl.BlockSpec((batch_tile, d_pad), lambda i: (i, 0)),
                pl.BlockSpec((num_layers, d_pad, d_pad), lambda i: (0, 0, 0)),
                pl.BlockSpec((num_layers, 1, d_pad), lambda i: (0, 0, 0)),
            ],
            out_specs=pl.BlockSpec((batch_tile, d_pad), lambda i: (i, 0)),
            compiler_params=pltpu.CompilerParams(
                dimension_semantics=("parallel",)),
            cost_estimate=cost,
        )(x_pad, w, b)

    return out_pad[:B, :n_classes]


# --------------------------------------------------------------------------
# Init + pure-JAX reference (mirrors the torch module exactly).
# --------------------------------------------------------------------------
def init_custom_nn_params(key, layers, n_features, n_classes):
    """Deterministic init mirroring torch.nn.Linear default U[-1/sqrt(fan_in), +]."""
    layers_in = [n_features] + list(layers)
    layers_out = list(layers) + [n_classes]
    params = {"f": [], "clf": None}
    for din, dout in zip(layers_in, layers_out):
        key, kw, kb = jax.random.split(key, 3)
        bound = 1.0 / jnp.sqrt(jnp.float32(din))
        w = jax.random.uniform(kw, (din, dout), jnp.float32, -bound, bound)
        b = jax.random.uniform(kb, (1, dout), jnp.float32, -bound, bound)
        params["f"].append((w, b))
    key, kw, kb = jax.random.split(key, 3)
    bound = 1.0 / jnp.sqrt(jnp.float32(n_classes))
    w = jax.random.uniform(kw, (n_classes, n_classes), jnp.float32, -bound, bound)
    b = jax.random.uniform(kb, (1, n_classes), jnp.float32, -bound, bound)
    params["clf"] = (w, b)
    return params


def custom_nn_reference(params, x, activation="sigmoid"):
    y = x
    for w, b in params["f"]:
        y = y @ w + b
        y = jax.nn.sigmoid(y) if activation == "sigmoid" else jnp.maximum(y, 0.0)
    w_clf, b_clf = params["clf"]
    return y @ w_clf + b_clf


if __name__ == "__main__":
    key = jax.random.PRNGKey(0)
    key, kx = jax.random.split(key)

    batch = 16
    n_features = 32
    hidden_layers = [64, 32]
    n_classes = 8

    x = jax.random.normal(kx, (batch, n_features), jnp.float32)
    params = init_custom_nn_params(key, hidden_layers, n_features, n_classes)
    ref = custom_nn_reference(params, x, activation="sigmoid")

    # 1) Exact path: f32 MXU inputs, exact reciprocal -> tight tolerance.
    prepped_f32 = prepare_custom_nn_params(params, mxu_dtype=jnp.float32)
    out = jax.block_until_ready(custom_nn_forward(prepped_f32, x, activation="sigmoid"))
    assert out.shape == (batch, n_classes)
    assert jnp.allclose(out, ref, atol=1e-5, rtol=1e-5)

    # 2) Fused ReLU branch.
    out_relu = jax.block_until_ready(custom_nn_forward(prepped_f32, x, activation="relu"))
    ref_relu = custom_nn_reference(params, x, activation="relu")
    assert jnp.allclose(out_relu, ref_relu, atol=1e-5, rtol=1e-5)

    # 3) Fast path: bf16 MXU inputs (f32 accumulation / f32 activations).
    prepped_bf16 = prepare_custom_nn_params(params, mxu_dtype=jnp.bfloat16)
    out_bf16 = jax.block_until_ready(custom_nn_forward(prepped_bf16, x, activation="sigmoid"))
    assert jnp.allclose(out_bf16, ref, atol=5e-2, rtol=5e-2)

    # 4) Batch-tiled "parallel" grid path (v7x 2-TC sharding at larger batch),
    #    exercised here with a small tile so the test stays tiny.
    key, kx2 = jax.random.split(key)
    x_big = jax.random.normal(kx2, (160, n_features), jnp.float32)
    out_big = jax.block_until_ready(
        custom_nn_forward(prepped_f32, x_big, activation="sigmoid", batch_tile=64))
    ref_big = custom_nn_reference(params, x_big, activation="sigmoid")
    assert out_big.shape == (160, n_classes)
    assert jnp.allclose(out_big, ref_big, atol=1e-5, rtol=1e-5)

    print("KERNEL_OK")
</pallas_src>

<mosaic_0001>
module attributes {stable_mosaic.version = 11 : i64} {
  func.func @_fused_mlp_kernel(%arg0: memref<16x128xf32, #tpu.memory_space<vmem>>, %arg1: memref<4x128x128xf32, #tpu.memory_space<vmem>>, %arg2: memref<4x1x128xf32, #tpu.memory_space<vmem>>, %arg3: memref<16x128xf32, #tpu.memory_space<vmem>>) attributes {dimension_semantics = [], scalar_prefetch = 0 : i64, scratch_operands = 0 : i64, tpu.core_type = #tpu.core_type<tc>} {
    %c0 = arith.constant 0 : index
    %c0_0 = arith.constant 0 : index
    %0 = vector.load %arg0[%c0, %c0_0] : memref<16x128xf32, #tpu.memory_space<vmem>>, vector<16x128xf32>
    %c0_1 = arith.constant 0 : index
    %c0_2 = arith.constant 0 : index
    %c0_3 = arith.constant 0 : index
    %1 = vector.load %arg1[%c0_1, %c0_2, %c0_3] : memref<4x128x128xf32, #tpu.memory_space<vmem>>, vector<1x128x128xf32>
    %2 = vector.shape_cast %1 : vector<1x128x128xf32> to vector<128x128xf32>
    %c0_4 = arith.constant 0 : index
    %c0_5 = arith.constant 0 : index
    %c0_6 = arith.constant 0 : index
    %3 = vector.load %arg2[%c0_4, %c0_5, %c0_6] : memref<4x1x128xf32, #tpu.memory_space<vmem>>, vector<1x1x128xf32>
    %4 = vector.shape_cast %3 : vector<1x1x128xf32> to vector<1x128xf32>
    %cst = arith.constant dense<0.000000e+00> : vector<16x128xf32>
    %5 = tpu.matmul %0, %2, %cst {dimension_numbers = #tpu.dot_dimension_numbers<[1], [0], [0], [1], [0, 0, 1, 1], [], []>} : vector<16x128xf32>, vector<128x128xf32>, vector<16x128xf32> -> vector<16x128xf32>
    %6 = vector.broadcast %4 : vector<1x128xf32> to vector<16x128xf32>
    %7 = arith.addf %5, %6 : vector<16x128xf32>
    %cst_7 = arith.constant 0.000000e+00 : f32
    %8 = vector.broadcast %cst_7 : f32 to vector<16x128xf32>
    %9 = arith.subf %8, %7 : vector<16x128xf32>
    %10 = math.exp %9 : vector<16x128xf32>
    %cst_8 = arith.constant 1.000000e+00 : f32
    %11 = vector.broadcast %cst_8 : f32 to vector<16x128xf32>
    %12 = arith.addf %11, %10 : vector<16x128xf32>
    %13 = tpu.reciprocal %12 : vector<16x128xf32> -> vector<16x128xf32>
    %c1 = arith.constant 1 : index
    %c0_9 = arith.constant 0 : index
    %c0_10 = arith.constant 0 : index
    %14 = vector.load %arg1[%c1, %c0_9, %c0_10] : memref<4x128x128xf32, #tpu.memory_space<vmem>>, vector<1x128x128xf32>
    %15 = vector.shape_cast %14 : vector<1x128x128xf32> to vector<128x128xf32>
    %c1_11 = arith.constant 1 : index
    %c0_12 = arith.constant 0 : index
    %c0_13 = arith.constant 0 : index
    %16 = vector.load %arg2[%c1_11, %c0_12, %c0_13] : memref<4x1x128xf32, #tpu.memory_space<vmem>>, vector<1x1x128xf32>
    %17 = vector.shape_cast %16 : vector<1x1x128xf32> to vector<1x128xf32>
    %cst_14 = arith.constant dense<0.000000e+00> : vector<16x128xf32>
    %18 = tpu.matmul %13, %15, %cst_14 {dimension_numbers = #tpu.dot_dimension_numbers<[1], [0], [0], [1], [0, 0, 1, 1], [], []>} : vector<16x128xf32>, vector<128x128xf32>, vector<16x128xf32> -> vector<16x128xf32>
    %19 = vector.broadcast %17 : vector<1x128xf32> to vector<16x128xf32>
    %20 = arith.addf %18, %19 : vector<16x128xf32>
    %cst_15 = arith.constant 0.000000e+00 : f32
    %21 = vector.broadcast %cst_15 : f32 to vector<16x128xf32>
    %22 = arith.subf %21, %20 : vector<16x128xf32>
    %23 = math.exp %22 : vector<16x128xf32>
    %cst_16 = arith.constant 1.000000e+00 : f32
    %24 = vector.broadcast %cst_16 : f32 to vector<16x128xf32>
    %25 = arith.addf %24, %23 : vector<16x128xf32>
    %26 = tpu.reciprocal %25 : vector<16x128xf32> -> vector<16x128xf32>
    %c2 = arith.constant 2 : index
    %c0_17 = arith.constant 0 : index
    %c0_18 = arith.constant 0 : index
    %27 = vector.load %arg1[%c2, %c0_17, %c0_18] : memref<4x128x128xf32, #tpu.memory_space<vmem>>, vector<1x128x128xf32>
    %28 = vector.shape_cast %27 : vector<1x128x128xf32> to vector<128x128xf32>
    %c2_19 = arith.constant 2 : index
    %c0_20 = arith.constant 0 : index
    %c0_21 = arith.constant 0 : index
    %29 = vector.load %arg2[%c2_19, %c0_20, %c0_21] : memref<4x1x128xf32, #tpu.memory_space<vmem>>, vector<1x1x128xf32>
    %30 = vector.shape_cast %29 : vector<1x1x128xf32> to vector<1x128xf32>
    %cst_22 = arith.constant dense<0.000000e+00> : vector<16x128xf32>
    %31 = tpu.matmul %26, %28, %cst_22 {dimension_numbers = #tpu.dot_dimension_numbers<[1], [0], [0], [1], [0, 0, 1, 1], [], []>} : vector<16x128xf32>, vector<128x128xf32>, vector<16x128xf32> -> vector<16x128xf32>
    %32 = vector.broadcast %30 : vector<1x128xf32> to vector<16x128xf32>
    %33 = arith.addf %31, %32 : vector<16x128xf32>
    %cst_23 = arith.constant 0.000000e+00 : f32
    %34 = vector.broadcast %cst_23 : f32 to vector<16x128xf32>
    %35 = arith.subf %34, %33 : vector<16x128xf32>
    %36 = math.exp %35 : vector<16x128xf32>
    %cst_24 = arith.constant 1.000000e+00 : f32
    %37 = vector.broadcast %cst_24 : f32 to vector<16x128xf32>
    %38 = arith.addf %37, %36 : vector<16x128xf32>
    %39 = tpu.reciprocal %38 : vector<16x128xf32> -> vector<16x128xf32>
    %c3 = arith.constant 3 : index
    %c0_25 = arith.constant 0 : index
    %c0_26 = arith.constant 0 : index
    %40 = vector.load %arg1[%c3, %c0_25, %c0_26] : memref<4x128x128xf32, #tpu.memory_space<vmem>>, vector<1x128x128xf32>
    %41 = vector.shape_cast %40 : vector<1x128x128xf32> to vector<128x128xf32>
    %c3_27 = arith.constant 3 : index
    %c0_28 = arith.constant 0 : index
    %c0_29 = arith.constant 0 : index
    %42 = vector.load %arg2[%c3_27, %c0_28, %c0_29] : memref<4x1x128xf32, #tpu.memory_space<vmem>>, vector<1x1x128xf32>
    %43 = vector.shape_cast %42 : vector<1x1x128xf32> to vector<1x128xf32>
    %cst_30 = arith.constant dense<0.000000e+00> : vector<16x128xf32>
    %44 = tpu.matmul %39, %41, %cst_30 {dimension_numbers = #tpu.dot_dimension_numbers<[1], [0], [0], [1], [0, 0, 1, 1], [], []>} : vector<16x128xf32>, vector<128x128xf32>, vector<16x128xf32> -> vector<16x128xf32>
    %45 = vector.broadcast %43 : vector<1x128xf32> to vector<16x128xf32>
    %46 = arith.addf %44, %45 : vector<16x128xf32>
    %c0_31 = arith.constant 0 : index
    %c0_32 = arith.constant 0 : index
    %47 = vector.load %arg3[%c0_31, %c0_32] : memref<16x128xf32, #tpu.memory_space<vmem>>, vector<16x128xf32>
    tpu.vector_store %arg3[%c0_31, %c0_32], %46 {strides = array<i32>} : memref<16x128xf32, #tpu.memory_space<vmem>>, vector<16x128xf32>,
    return
  }
}

</mosaic_0001>

<llo_original>
// kernel: tpu_custom_call.1
$region0: #{tpu_custom_call.1}
  #allocation0 [shape = 'u32[]', space=smem, size = 0x4, offset = 0x4, fixed_abs, tag = 'smem constant byte address 0x4 - core index']
  #allocation1 [shape = 'u32[72,128]{1,0:T(1,128)}', space=vmem, size = 0x9000, scoped, tag = 'internal scratch']
  %s0 = inlined_call_operand.hbm [shape: f32[16,128], index: 0, kind: input, shape index: {}]
  %s1 = inlined_call_operand.hbm [shape: f32[4,128,128], index: 1, kind: input, shape index: {}]
  %s2 = inlined_call_operand.hbm [shape: f32[4,1,128], index: 2, kind: input, shape index: {}]
  %s3 = inlined_call_operand.hbm [shape: f32[16,128], index: 3, kind: output, shape index: {}]
  %s4 = sld [smem:[#allocation0]]
  $region34: #{tpu_custom_call.1} parent=0
    _
  %s6 = ssub.s32 1, %s4
  %s7 = scalar_select 0, %s6, %s4
  $region1: #{tpu_custom_call.1} parent=0
    #allocation2 [shape = 'u8[8192]{0}', space=vmem, size = 0x2000, scoped, tag = 'input window, operand 0, single buffered']
    #allocation3 [shape = 's32[1]{0}', space=sflag, size = 0x4, scoped, tag = 'scoped memory for tpu_custom_call.1']
    #allocation4 [shape = 's32[1]{0}', space=sflag, size = 0x4, scoped, tag = 'scoped memory for tpu_custom_call.1']
    #allocation5 [shape = 'u8[262144]{0}', space=vmem, size = 0x40000, scoped, tag = 'input window, operand 1, single buffered']
    #allocation6 [shape = 's32[1]{0}', space=sflag, size = 0x4, scoped, tag = 'scoped memory for tpu_custom_call.1']
    #allocation7 [shape = 'u8[2048]{0}', space=vmem, size = 0x800, scoped, tag = 'input window, operand 2, single buffered']
    #allocation8 [shape = 'u8[8192]{0}', space=vmem, size = 0x2000, scoped, tag = 'output window, operand 0, single buffered']
    %8 = vsyncpa [#allocation3], 0
    %9 = vsyncpa [#allocation6], 0
    %10 = vsyncpa [#allocation4], 0
    // Predicated region
    $region2: #{tpu_custom_call.1} parent=1 // pred_check
      _
    $region3: #{tpu_custom_call.1} parent=1 // pred_check_branch
      %12 = sbr.rel (0) target = $region5
    $region4: #{tpu_custom_call.1} parent=1 // pred_region
      %14 = vsyncadd [#allocation3], 0
      %s15 = sshll.u32 %s0, 4
      %s16 = int_to_ptr.hbm [resolvable:$true] %s15
      %s17 = sshll.u32 [#allocation2], 4
      %s18 = int_to_ptr.vmem [resolvable:$true] %s17
      %23 = dma.hbm_to_vmem [thread:$0]  %s16, 256, %s18, [#allocation3], 128, 128, 8
    $region5: #{tpu_custom_call.1} parent=1 // pred_fallthru
      _
    // Predicated region
    $region6: #{tpu_custom_call.1} parent=1 // pred_check
      _
    $region7: #{tpu_custom_call.1} parent=1 // pred_check_branch
      %25 = sbr.rel (0) target = $region9
    $region8: #{tpu_custom_call.1} parent=1 // pred_region
      %27 = vsyncadd [#allocation6], 0
      %s28 = sshll.u32 %s1, 4
      %s29 = int_to_ptr.hbm [resolvable:$true] %s28
      %s30 = sshll.u32 [#allocation5], 4
      %s31 = int_to_ptr.vmem [resolvable:$true] %s30
      %36 = dma.hbm_to_vmem [thread:$0]  %s29, 8192, %s31, [#allocation6], 128, 128, 8
    $region9: #{tpu_custom_call.1} parent=1 // pred_fallthru
      _
    // Predicated region
    $region10: #{tpu_custom_call.1} parent=1 // pred_check
      _
    $region11: #{tpu_custom_call.1} parent=1 // pred_check_branch
      %38 = sbr.rel (0) target = $region13
    $region12: #{tpu_custom_call.1} parent=1 // pred_region
      %40 = vsyncadd [#allocation6], 0
      %s41 = sshll.u32 %s2, 4
      %s42 = int_to_ptr.hbm [resolvable:$true] %s41
      %s43 = sshll.u32 [#allocation7], 4
      %s44 = int_to_ptr.vmem [resolvable:$true] %s43
      %49 = dma.hbm_to_vmem [thread:$0]  %s42, 64, %s44, [#allocation6], 16, 16, 1
    $region13: #{tpu_custom_call.1} parent=1 // pred_fallthru
      _
    // Predicated region
    $region14: #{tpu_custom_call.1} parent=1 // pred_check
      _
    $region15: #{tpu_custom_call.1} parent=1 // pred_check_branch
      %51 = sbr.rel (0) target = $region17
    $region16: #{tpu_custom_call.1} parent=1 // pred_region
      %53 = dma.done [#allocation3], 256
    $region17: #{tpu_custom_call.1} parent=1 // pred_fallthru
      _
    // Predicated region
    $region18: #{tpu_custom_call.1} parent=1 // pred_check
      _
    $region19: #{tpu_custom_call.1} parent=1 // pred_check_branch
      %55 = sbr.rel (0) target = $region21
    $region20: #{tpu_custom_call.1} parent=1 // pred_region
      %57 = dma.done [#allocation6], 8192
    $region21: #{tpu_custom_call.1} parent=1 // pred_fallthru
      _
    // Predicated region
    $region22: #{tpu_custom_call.1} parent=1 // pred_check
      _
    $region23: #{tpu_custom_call.1} parent=1 // pred_check_branch
      %59 = sbr.rel (0) target = $region25
    $region24: #{tpu_custom_call.1} parent=1 // pred_region
      %61 = dma.done [#allocation6], 64
    $region25: #{tpu_custom_call.1} parent=1 // pred_fallthru
      _
    %v62 = vld [vmem:[#allocation2] sm:$0xff]
    %v63 = vld [vmem:[#allocation2 + $0x8] sm:$0xff]
    %v64 = vld [vmem:[#allocation5] sm:$0xff]
    %v65 = vld [vmem:[#allocation5 + $0x8] sm:$0xff]
    %v66 = vld [vmem:[#allocation5 + $0x10] sm:$0xff]
    %v67 = vld [vmem:[#allocation5 + $0x18] sm:$0xff]
    %v68 = vld [vmem:[#allocation5 + $0x20] sm:$0xff]
    %v69 = vld [vmem:[#allocation5 + $0x28] sm:$0xff]
    %v70 = vld [vmem:[#allocation5 + $0x30] sm:$0xff]
    %v71 = vld [vmem:[#allocation5 + $0x38] sm:$0xff]
    %v72 = vld [vmem:[#allocation5 + $0x40] sm:$0xff]
    %v73 = vld [vmem:[#allocation5 + $0x48] sm:$0xff]
    %v74 = vld [vmem:[#allocation5 + $0x50] sm:$0xff]
    %v75 = vld [vmem:[#allocation5 + $0x58] sm:$0xff]
    %v76 = vld [vmem:[#allocation5 + $0x60] sm:$0xff]
    %v77 = vld [vmem:[#allocation5 + $0x68] sm:$0xff]
    %v78 = vld [vmem:[#allocation5 + $0x70] sm:$0xff]
    %v79 = vld [vmem:[#allocation5 + $0x78] sm:$0xff]
    %v80 = vld [vmem:[#allocation7] sm:$0x1]
    %v82 = vperm.slane %v80, 0
    %84 = vmatpush.msra.mxu0 %v79
    %85 = vmatpush.msra.mxu0 %v78
    %86 = vmatpush.msra.mxu0 %v77
    %87 = vmatpush.msra.mxu0 %v76
    %88 = vmatpush.msra.mxu0 %v75
    %89 = vmatpush.msra.mxu0 %v74
    %90 = vmatpush.msra.mxu0 %v73
    %91 = vmatpush.msra.mxu0 %v72
    %92 = vmatpush.msra.mxu0 %v71
    %93 = vmatpush.msra.mxu0 %v70
    %94 = vmatpush.msra.mxu0 %v69
    %95 = vmatpush.msra.mxu0 %v68
    %96 = vmatpush.msra.mxu0 %v67
    %97 = vmatpush.msra.mxu0 %v66
    %98 = vmatpush.msra.mxu0 %v65
    %99 = vmatpush.msra.mxu0 %v64
    %100 = vmatmul.f32.gmra.mxu0 %v62
    %v101 = vpop.f32.mrf.mxu0
    %v102 = vadd.f32 %v82, %v101
    %103 = vmatmul.f32.gmra.mxu0 %v63
    %v104 = vpop.f32.mrf.mxu0
    %v105 = vadd.f32 %v82, %v104
    %106 = vdwg.mxu0
    %v107 = vsub.f32 0.0, %v102
    %v108 = vsub.f32 0.0, %v105
    %v109 = vmul.f32 %v107, 1.442695
    %v110 = vpow.pop %v109
    %v111 = vmul.f32 %v108, 1.442695
    %v112 = vpow.pop %v111
    %v113 = vadd.f32 %v110, 1.0
    %v114 = vadd.f32 %v112, 1.0
    %v115 = vrcp.pop %v113
    %v116 = vmul.f32 %v113, %v115
    %v117 = vsub.f32 1.0, %v116
    %v118 = vmul.f32 %v115, %v117
    %v119 = vadd.f32 %v115, %v118
    %vm120 = vweird.f32 %v113
    %vm121 = vweird.f32 %v115
    %vm122 = vmor %vm120, %vm121
    %v123 = vsel %vm122, %v115, %v119
    %v124 = vand.u32 2147483647, %v113
    %vm125 = vcmp.eq.f32.partialorder %v124, 8.507059e+37
    %v126 = vand.u32 %v113, 2147483648
    %v127 = vor.u32 1.1754944e-38, %v126
    %v128 = vsel %vm125, %v127, %v123
    %v129 = vrcp.pop %v114
    %v130 = vmul.f32 %v114, %v129
    %v131 = vsub.f32 1.0, %v130
    %v132 = vmul.f32 %v129, %v131
    %v133 = vadd.f32 %v129, %v132
    %vm134 = vweird.f32 %v114
    %vm135 = vweird.f32 %v129
    %vm136 = vmor %vm134, %vm135
    %v137 = vsel %vm136, %v129, %v133
    %v138 = vand.u32 2147483647, %v114
    %vm139 = vcmp.eq.f32.partialorder %v138, 8.507059e+37
    %v140 = vand.u32 %v114, 2147483648
    %v141 = vor.u32 1.1754944e-38, %v140
    %v142 = vsel %vm139, %v141, %v137
    %s143 = scalar_lea.vmem [#allocation5], 128
    %v144 = vld [vmem:[%s143] sm:$0xff]
    %v145 = vld [vmem:[%s143 + $0x8] sm:$0xff]
    %v146 = vld [vmem:[%s143 + $0x10] sm:$0xff]
    %v147 = vld [vmem:[%s143 + $0x18] sm:$0xff]
    %v148 = vld [vmem:[%s143 + $0x20] sm:$0xff]
    %v149 = vld [vmem:[%s143 + $0x28] sm:$0xff]
    %v150 = vld [vmem:[%s143 + $0x30] sm:$0xff]
    %v151 = vld [vmem:[%s143 + $0x38] sm:$0xff]
    %v152 = vld [vmem:[%s143 + $0x40] sm:$0xff]
    %v153 = vld [vmem:[%s143 + $0x48] sm:$0xff]
    %v154 = vld [vmem:[%s143 + $0x50] sm:$0xff]
    %v155 = vld [vmem:[%s143 + $0x58] sm:$0xff]
    %v156 = vld [vmem:[%s143 + $0x60] sm:$0xff]
    %v157 = vld [vmem:[%s143 + $0x68] sm:$0xff]
    %v158 = vld [vmem:[%s143 + $0x70] sm:$0xff]
    %v159 = vld [vmem:[%s143 + $0x78] sm:$0xff]
    %s160 = scalar_lea.vmem [#allocation7], 1
    %v161 = vld [vmem:[%s160] sm:$0x1]
    %v163 = vperm.slane %v161, 0
    %165 = vmatpush.msra.mxu0 %v159
    %166 = vmatpush.msra.mxu0 %v158
    %167 = vmatpush.msra.mxu0 %v157
    %168 = vmatpush.msra.mxu0 %v156
    %169 = vmatpush.msra.mxu0 %v155
    %170 = vmatpush.msra.mxu0 %v154
    %171 = vmatpush.msra.mxu0 %v153
    %172 = vmatpush.msra.mxu0 %v152
    %173 = vmatpush.msra.mxu0 %v151
    %174 = vmatpush.msra.mxu0 %v150
    %175 = vmatpush.msra.mxu0 %v149
    %176 = vmatpush.msra.mxu0 %v148
    %177 = vmatpush.msra.mxu0 %v147
    %178 = vmatpush.msra.mxu0 %v146
    %179 = vmatpush.msra.mxu0 %v145
    %180 = vmatpush.msra.mxu0 %v144
    %181 = vmatmul.f32.gmra.mxu0 %v128
    %v182 = vpop.f32.mrf.mxu0
    %v183 = vadd.f32 %v163, %v182
    %184 = vmatmul.f32.gmra.mxu0 %v142
    %v185 = vpop.f32.mrf.mxu0
    %v186 = vadd.f32 %v163, %v185
    %187 = vdwg.mxu0
    %v188 = vsub.f32 0.0, %v183
    %v189 = vsub.f32 0.0, %v186
    %v190 = vmul.f32 %v188, 1.442695
    %v191 = vpow.pop %v190
    %v192 = vmul.f32 %v189, 1.442695
    %v193 = vpow.pop %v192
    %v194 = vadd.f32 %v191, 1.0
    %v195 = vadd.f32 %v193, 1.0
    %v196 = vrcp.pop %v194
    %v197 = vmul.f32 %v194, %v196
    %v198 = vsub.f32 1.0, %v197
    %v199 = vmul.f32 %v196, %v198
    %v200 = vadd.f32 %v196, %v199
    %vm201 = vweird.f32 %v194
    %vm202 = vweird.f32 %v196
    %vm203 = vmor %vm201, %vm202
    %v204 = vsel %vm203, %v196, %v200
    %v205 = vand.u32 2147483647, %v194
    %vm206 = vcmp.eq.f32.partialorder %v205, 8.507059e+37
    %v207 = vand.u32 %v194, 2147483648
    %v208 = vor.u32 1.1754944e-38, %v207
    %v209 = vsel %vm206, %v208, %v204
    %v210 = vrcp.pop %v195
    %v211 = vmul.f32 %v195, %v210
    %v212 = vsub.f32 1.0, %v211
    %v213 = vmul.f32 %v210, %v212
    %v214 = vadd.f32 %v210, %v213
    %vm215 = vweird.f32 %v195
    %vm216 = vweird.f32 %v210
    %vm217 = vmor %vm215, %vm216
    %v218 = vsel %vm217, %v210, %v214
    %v219 = vand.u32 2147483647, %v195
    %vm220 = vcmp.eq.f32.partialorder %v219, 8.507059e+37
    %v221 = vand.u32 %v195, 2147483648
    %v222 = vor.u32 1.1754944e-38, %v221
    %v223 = vsel %vm220, %v222, %v218
    %s224 = scalar_lea.vmem [#allocation5], 256
    %v225 = vld [vmem:[%s224] sm:$0xff]
    %v226 = vld [vmem:[%s224 + $0x8] sm:$0xff]
    %v227 = vld [vmem:[%s224 + $0x10] sm:$0xff]
    %v228 = vld [vmem:[%s224 + $0x18] sm:$0xff]
    %v229 = vld [vmem:[%s224 + $0x20] sm:$0xff]
    %v230 = vld [vmem:[%s224 + $0x28] sm:$0xff]
    %v231 = vld [vmem:[%s224 + $0x30] sm:$0xff]
    %v232 = vld [vmem:[%s224 + $0x38] sm:$0xff]
    %v233 = vld [vmem:[%s224 + $0x40] sm:$0xff]
    %v234 = vld [vmem:[%s224 + $0x48] sm:$0xff]
    %v235 = vld [vmem:[%s224 + $0x50] sm:$0xff]
    %v236 = vld [vmem:[%s224 + $0x58] sm:$0xff]
    %v237 = vld [vmem:[%s224 + $0x60] sm:$0xff]
    %v238 = vld [vmem:[%s224 + $0x68] sm:$0xff]
    %v239 = vld [vmem:[%s224 + $0x70] sm:$0xff]
    %v240 = vld [vmem:[%s224 + $0x78] sm:$0xff]
    %s241 = scalar_lea.vmem [#allocation7], 2
    %v242 = vld [vmem:[%s241] sm:$0x1]
    %v244 = vperm.slane %v242, 0
    %246 = vmatpush.msra.mxu0 %v240
    %247 = vmatpush.msra.mxu0 %v239
    %248 = vmatpush.msra.mxu0 %v238
    %249 = vmatpush.msra.mxu0 %v237
    %250 = vmatpush.msra.mxu0 %v236
    %251 = vmatpush.msra.mxu0 %v235
    %252 = vmatpush.msra.mxu0 %v234
    %253 = vmatpush.msra.mxu0 %v233
    %254 = vmatpush.msra.mxu0 %v232
    %255 = vmatpush.msra.mxu0 %v231
    %256 = vmatpush.msra.mxu0 %v230
    %257 = vmatpush.msra.mxu0 %v229
    %258 = vmatpush.msra.mxu0 %v228
    %259 = vmatpush.msra.mxu0 %v227
    %260 = vmatpush.msra.mxu0 %v226
    %261 = vmatpush.msra.mxu0 %v225
    %262 = vmatmul.f32.gmra.mxu0 %v209
    %v263 = vpop.f32.mrf.mxu0
    %v264 = vadd.f32 %v244, %v263
    %265 = vmatmul.f32.gmra.mxu0 %v223
    %v266 = vpop.f32.mrf.mxu0
    %v267 = vadd.f32 %v244, %v266
    %268 = vdwg.mxu0
    %v269 = vsub.f32 0.0, %v264
    %v270 = vsub.f32 0.0, %v267
    %v271 = vmul.f32 %v269, 1.442695
    %v272 = vpow.pop %v271
    %v273 = vmul.f32 %v270, 1.442695
    %v274 = vpow.pop %v273
    %v275 = vadd.f32 %v272, 1.0
    %v276 = vadd.f32 %v274, 1.0
    %v277 = vrcp.pop %v275
    %v278 = vmul.f32 %v275, %v277
    %v279 = vsub.f32 1.0, %v278
    %v280 = vmul.f32 %v277, %v279
    %v281 = vadd.f32 %v277, %v280
    %vm282 = vweird.f32 %v275
    %vm283 = vweird.f32 %v277
    %vm284 = vmor %vm282, %vm283
    %v285 = vsel %vm284, %v277, %v281
    %v286 = vand.u32 2147483647, %v275
    %vm287 = vcmp.eq.f32.partialorder %v286, 8.507059e+37
    %v288 = vand.u32 %v275, 2147483648
    %v289 = vor.u32 1.1754944e-38, %v288
    %v290 = vsel %vm287, %v289, %v285
    %v291 = vrcp.pop %v276
    %v292 = vmul.f32 %v276, %v291
    %v293 = vsub.f32 1.0, %v292
    %v294 = vmul.f32 %v291, %v293
    %v295 = vadd.f32 %v291, %v294
    %vm296 = vweird.f32 %v276
    %vm297 = vweird.f32 %v291
    %vm298 = vmor %vm296, %vm297
    %v299 = vsel %vm298, %v291, %v295
    %v300 = vand.u32 2147483647, %v276
    %vm301 = vcmp.eq.f32.partialorder %v300, 8.507059e+37
    %v302 = vand.u32 %v276, 2147483648
    %v303 = vor.u32 1.1754944e-38, %v302
    %v304 = vsel %vm301, %v303, %v299
    %s305 = scalar_lea.vmem [#allocation5], 384
    %v306 = vld [vmem:[%s305] sm:$0xff]
    %v307 = vld [vmem:[%s305 + $0x8] sm:$0xff]
    %v308 = vld [vmem:[%s305 + $0x10] sm:$0xff]
    %v309 = vld [vmem:[%s305 + $0x18] sm:$0xff]
    %v310 = vld [vmem:[%s305 + $0x20] sm:$0xff]
    %v311 = vld [vmem:[%s305 + $0x28] sm:$0xff]
    %v312 = vld [vmem:[%s305 + $0x30] sm:$0xff]
    %v313 = vld [vmem:[%s305 + $0x38] sm:$0xff]
    %v314 = vld [vmem:[%s305 + $0x40] sm:$0xff]
    %v315 = vld [vmem:[%s305 + $0x48] sm:$0xff]
    %v316 = vld [vmem:[%s305 + $0x50] sm:$0xff]
    %v317 = vld [vmem:[%s305 + $0x58] sm:$0xff]
    %v318 = vld [vmem:[%s305 + $0x60] sm:$0xff]
    %v319 = vld [vmem:[%s305 + $0x68] sm:$0xff]
    %v320 = vld [vmem:[%s305 + $0x70] sm:$0xff]
    %v321 = vld [vmem:[%s305 + $0x78] sm:$0xff]
    %s322 = scalar_lea.vmem [#allocation7], 3
    %v323 = vld [vmem:[%s322] sm:$0x1]
    %v325 = vperm.slane %v323, 0
    %327 = vmatpush.msra.mxu0 %v321
    %328 = vmatpush.msra.mxu0 %v320
    %329 = vmatpush.msra.mxu0 %v319
    %330 = vmatpush.msra.mxu0 %v318
    %331 = vmatpush.msra.mxu0 %v317
    %332 = vmatpush.msra.mxu0 %v316
    %333 = vmatpush.msra.mxu0 %v315
    %334 = vmatpush.msra.mxu0 %v314
    %335 = vmatpush.msra.mxu0 %v313
    %336 = vmatpush.msra.mxu0 %v312
    %337 = vmatpush.msra.mxu0 %v311
    %338 = vmatpush.msra.mxu0 %v310
    %339 = vmatpush.msra.mxu0 %v309
    %340 = vmatpush.msra.mxu0 %v308
    %341 = vmatpush.msra.mxu0 %v307
    %342 = vmatpush.msra.mxu0 %v306
    %343 = vmatmul.f32.gmra.mxu0 %v290
    %v344 = vpop.f32.mrf.mxu0
    %v345 = vadd.f32 %v325, %v344
    %346 = vmatmul.f32.gmra.mxu0 %v304
    %v347 = vpop.f32.mrf.mxu0
    %v348 = vadd.f32 %v325, %v347
    %349 = vdwg.mxu0
    %350 = vst [vmem:[#allocation8] sm:$0xff] %v345
    %351 = vst [vmem:[#allocation8 + $0x8] sm:$0xff] %v348
    // Predicated region
    $region26: #{tpu_custom_call.1} parent=1 // pred_check
      _
    $region27: #{tpu_custom_call.1} parent=1 // pred_check_branch
      %353 = sbr.rel (0) target = $region29
    $region28: #{tpu_custom_call.1} parent=1 // pred_region
      %355 = vsyncadd [#allocation4], 0
      %s356 = sshll.u32 [#allocation8], 4
      %s357 = int_to_ptr.vmem [resolvable:$true] %s356
      %s358 = sshll.u32 %s3, 4
      %s359 = int_to_ptr.hbm [resolvable:$true] %s358
      %364 = dma.vmem_to_hbm [thread:$0]  %s357, 256, %s359, [#allocation4], 128, 128, 8
    $region29: #{tpu_custom_call.1} parent=1 // pred_fallthru
      _
    // Predicated region
    $region30: #{tpu_custom_call.1} parent=1 // pred_check
      _
    $region31: #{tpu_custom_call.1} parent=1 // pred_check_branch
      %366 = sbr.rel (0) target = $region33
    $region32: #{tpu_custom_call.1} parent=1 // pred_region
      %368 = dma.done [#allocation4], 256
    $region33: #{tpu_custom_call.1} parent=1 // pred_fallthru
      _
    %369 = vsyncpa [#allocation3], 1
    %370 = vsyncpa [#allocation6], 1
    %371 = vsyncpa [#allocation4], 1

</llo_original>
